<compile_context>
chip_gen: v6e
topology: v6e:2x2x1
jax: 0.10.0
libtpu: 0.0.40
codegen_flags: <defaults>
</compile_context>

<pallas_src>
import functools

import jax
import jax.numpy as jnp
from jax.experimental import pallas as pl
from jax.experimental.pallas import tpu as pltpu

EPS = 1e-10


def _round_up(x, m):
    return (x + m - 1) // m * m


def _itemsize(dt):
    return jax.dtypes.canonicalize_dtype(dt).itemsize


def _gat_kernel(tk, fout, mxu_dtype, use_l1, use_free_lane, h_resident,
                adj_ref, hv_ref, f1_ref, f2_ref, out_ref, acc_ref, ss_ref):
    k = pl.program_id(1)

    @pl.when(k == 0)
    def _init():
        acc_ref[...] = jnp.zeros_like(acc_ref)
        if not use_free_lane:
            ss_ref[...] = jnp.zeros_like(ss_ref)

    # Value-side h tile (already mxu_dtype, pre-cast in the wrapper).
    if h_resident:
        start = pl.multiple_of(k * tk, 128)
        h_col = hv_ref[pl.ds(start, tk), :]            # slice of the resident h (tk, Fp)
    else:
        h_col = hv_ref[...]                            # streamed per column tile

    # e[i, j] = sigmoid(f1[i] + f2[j]) -- f1/f2 are precomputed per-node scalars.
    z = f1_ref[...] + f2_ref[...]                      # (tq, 1) + (1, tk) -> (tq, tk) f32
    e = jax.nn.sigmoid(z)                              # f32 on EUP (keep f32: v5e has no bf16 EUP)
    att = e * adj_ref[...].astype(jnp.float32)         # masked attention logits, f32

    # Deferred normalization: accumulate un-normalized att @ h and the row-norm statistic.
    acc_ref[...] += jnp.dot(att.astype(mxu_dtype), h_col,
                            preferred_element_type=jnp.float32)          # (tq, Fp) f32
    if not use_free_lane:
        if use_l1:
            # Faithful to the module for arbitrary adj; main L1 path uses the free lane.
            ss_ref[...] += jnp.sum(jnp.abs(att), axis=1, keepdims=True)  # (tq, 1)
        else:
            ss_ref[...] += jnp.sum(att * att, axis=1, keepdims=True)     # (tq, 1)

    @pl.when(k == pl.num_programs(1) - 1)
    def _finalize():
        acc = acc_ref[...]
        if use_free_lane:
            # h's ones-lane made acc[:, fout] the L1 row sum (adj >= 0) -- no extra pass.
            denom = acc[:, fout:fout + 1] + EPS
        elif use_l1:
            denom = ss_ref[...] + EPS
        else:
            denom = jnp.sqrt(ss_ref[...]) + EPS
        scale = pl.reciprocal(denom, approx=False)     # exact; once per row tile, (tq,1)
        out_ref[...] = (acc * scale).astype(out_ref.dtype)


def gat_layer(input_h, adj, W, a, *, tq=256, tk=512,
              mxu_dtype=jnp.bfloat16, adj_dtype=jnp.bfloat16,
              use_l1=None, h_resident_max_bytes=4 << 20):
    """GATLayer forward.

    input_h: (N, Fin) f32, adj: (N, N) f32 (non-negative mask / weights),
    W: (Fin, Fout) f32, a: (2*Fout, 1) f32.

    mxu_dtype: MXU operand dtype (bf16 default; f32 accumulation everywhere).
    adj_dtype: streaming dtype for the adjacency (bf16 default, exact for 0/1 masks;
               int8 possible for binary masks).
    use_l1:    None -> mirror the PyTorch module (L1 iff N in (2708, 2709)); bool to force.
    """
    N, _ = input_h.shape
    Fout = W.shape[1]
    if use_l1 is None:
        use_l1 = N in (2708, 2709)   # matches the module's Cora-specific branch
    use_l1 = bool(use_l1)

    # ---- One-time precompute in XLA (f32): h, and per-node scalars f1, f2. ----
    h = input_h @ W                                    # (N, Fout)
    f1 = h @ a[:Fout, 0]                               # (N,)  query-side scalar
    f2 = h @ a[Fout:, 0]                               # (N,)  key-side scalar

    # Lane-dense feature axis (pad columns of h are zero -> contribute nothing).
    Fp = _round_up(Fout, 128)
    use_free_lane = use_l1 and (Fp > Fout)

    # ---- Tiling: rows padded to a multiple of tq, columns to a multiple of tk. ----
    row_mult = 8 * (4 // _itemsize(adj_dtype))         # sublane packing: f32:8 bf16:16 i8:32
    tq_eff = min(_round_up(tq, row_mult), _round_up(N, row_mult))
    tk_eff = min(_round_up(tk, 128), _round_up(N, 128))
    nq = _round_up(N, tq_eff)
    nk = _round_up(N, tk_eff)

    # TODO(synk): cast+pad adj once at graph-setup time instead of per forward call.
    adjp = jnp.pad(adj.astype(adj_dtype), ((0, nq - N), (0, nk - N)))

    h_val = jnp.pad(h.astype(mxu_dtype), ((0, nk - N), (0, Fp - Fout)))
    if use_free_lane:
        # Ones-lane at column Fout: acc[:, Fout] = sum_j att[i, j] (L1 row sum) for free.
        h_val = h_val.at[:, Fout].set(jnp.asarray(1.0, mxu_dtype))
    f1p = jnp.pad(f1, (0, nq - N)).reshape(nq, 1)
    f2p = jnp.pad(f2, (0, nk - N)).reshape(1, nk)

    # Keep the whole h resident in VMEM when it fits (Cora bf16: ~0.7 MiB), so the only
    # per-step streamed operand is the adjacency tile.
    h_resident = (nk * Fp * _itemsize(mxu_dtype)) <= h_resident_max_bytes
    if h_resident:
        h_spec = pl.BlockSpec((nk, Fp), lambda i, k: (0, 0))
    else:
        h_spec = pl.BlockSpec((tk_eff, Fp), lambda i, k: (k, 0))

    grid = (nq // tq_eff, nk // tk_eff)
    kernel = functools.partial(_gat_kernel, tk_eff, Fout, mxu_dtype,
                               use_l1, use_free_lane, h_resident)

    # VMEM: adj tile (tq*tk*adj bytes, x2 buffers) + resident h (<= 2*limit) + acc/out
    # slabs -- a few MiB at the defaults, well under every generation's scoped default.
    out = pl.pallas_call(
        kernel,
        out_shape=jax.ShapeDtypeStruct((nq, Fp), jnp.float32),
        grid_spec=pltpu.PrefetchScalarGridSpec(
            num_scalar_prefetch=0,
            grid=grid,
            in_specs=[
                pl.BlockSpec((tq_eff, tk_eff), lambda i, k: (i, k)),   # adj tile (stream)
                h_spec,                                                # h (value side)
                pl.BlockSpec((tq_eff, 1), lambda i, k: (i, 0)),        # f1 (query scalars)
                pl.BlockSpec((1, tk_eff), lambda i, k: (0, k)),        # f2 (key scalars)
            ],
            out_specs=pl.BlockSpec((tq_eff, Fp), lambda i, k: (i, 0)),
            scratch_shapes=[
                pltpu.VMEM((tq_eff, Fp), jnp.float32),   # acc = unnormalized att @ h
                pltpu.VMEM((tq_eff, 1), jnp.float32),    # ss  = per-row norm statistic
            ],
        ),
        compiler_params=pltpu.CompilerParams(
            dimension_semantics=("parallel", "arbitrary")),
    )(adjp, h_val, f1p, f2p)

    return out[:N, :Fout]


def gat_layer_ref(input_h, adj, W, a, use_l1=None):
    """Pure-JAX reference mirroring the PyTorch forward."""
    h = input_h @ W
    Fout = W.shape[1]
    e = jax.nn.sigmoid(h @ a[:Fout, :] + (h @ a[Fout:, :]).T)
    att = e * adj
    N = adj.shape[0]
    if use_l1 is None:
        use_l1 = N in (2708, 2709)
    if use_l1:
        norm = jnp.sum(jnp.abs(att), axis=1, keepdims=True) + EPS
    else:
        norm = jnp.sqrt(jnp.sum(att * att, axis=1, keepdims=True)) + EPS
    return (att / norm) @ h


def xavier_uniform(key, shape, gain):
    fan_in, fan_out = shape[0], shape[1]
    bound = gain * jnp.sqrt(6.0 / (fan_in + fan_out))
    return jax.random.uniform(key, shape, jnp.float32, -bound, bound)


def _make_case(key, N, Fin, Fout, gain=1.414):
    k_w, k_a, k_x, k_adj = jax.random.split(key, 4)
    W = xavier_uniform(k_w, (Fin, Fout), gain)
    a = xavier_uniform(k_a, (2 * Fout, 1), gain)
    x = jax.random.normal(k_x, (N, Fin), jnp.float32)
    adj = (jax.random.uniform(k_adj, (N, N)) > 0.5).astype(jnp.float32)
    adj = jnp.minimum(adj + jnp.eye(N, dtype=jnp.float32), 1.0)  # self loops
    return x, adj, W, a


if __name__ == "__main__":
    # Case 1: toy shape, single-tile grid, default bf16 MXU / bf16 adj stream.
    x, adj, W, a = _make_case(jax.random.PRNGKey(0), N=8, Fin=16, Fout=32)
    out = jax.block_until_ready(gat_layer(x, adj, W, a))
    ref = gat_layer_ref(x, adj, W, a)
    assert out.shape == (8, 32)
    assert jnp.allclose(out, ref, atol=5e-2, rtol=5e-2), "mismatch (toy, bf16)"

    # Case 2: multi-tile grid (rows parallel, column reduction), exact f32 path.
    x2, adj2, W2, a2 = _make_case(jax.random.PRNGKey(1), N=200, Fin=16, Fout=32)
    out2 = jax.block_until_ready(
        gat_layer(x2, adj2, W2, a2, tq=64, tk=128,
                  mxu_dtype=jnp.float32, adj_dtype=jnp.float32))
    ref2 = gat_layer_ref(x2, adj2, W2, a2)
    assert out2.shape == (200, 32)
    assert jnp.allclose(out2, ref2, atol=5e-3, rtol=5e-3), "mismatch (tiled, f32)"

    # Case 3: production path (bf16 MXU operands + bf16 adj stream), L2 norm.
    out3 = jax.block_until_ready(gat_layer(x2, adj2, W2, a2, tq=64, tk=128))
    assert jnp.allclose(out3, ref2, atol=5e-2, rtol=5e-2), "mismatch (tiled, bf16)"

    # Case 4: L1 norm path with the free ones-lane row sum (forced; the default rule
    # keys L1 off N in (2708, 2709) exactly like the PyTorch module).
    out4 = jax.block_until_ready(
        gat_layer(x2, adj2, W2, a2, tq=64, tk=128, use_l1=True))
    ref4 = gat_layer_ref(x2, adj2, W2, a2, use_l1=True)
    assert jnp.allclose(out4, ref4, atol=5e-2, rtol=5e-2), "mismatch (tiled, bf16, l1)"

    print("KERNEL_OK")
</pallas_src>

<mosaic_0001>
module attributes {stable_mosaic.version = 11 : i64} {
  func.func @_gat_kernel(%arg0: i32, %arg1: i32, %arg2: memref<16x128xbf16, #tpu.memory_space<vmem>>, %arg3: memref<128x128xbf16, #tpu.memory_space<vmem>>, %arg4: memref<16x1xf32, #tpu.memory_space<vmem>>, %arg5: memref<1x128xf32, #tpu.memory_space<vmem>>, %arg6: memref<16x128xf32, #tpu.memory_space<vmem>>, %arg7: memref<16x128xf32, #tpu.memory_space<vmem>>, %arg8: memref<16x1xf32, #tpu.memory_space<vmem>>) attributes {dimension_semantics = [#tpu.dimension_semantics<parallel>, #tpu.dimension_semantics<arbitrary>], iteration_bounds = array<i64: 1, 1>, scalar_prefetch = 0 : i64, scratch_operands = 2 : i64, tpu.core_type = #tpu.core_type<tc>, window_params = [{transform_indices = @transform_0, window_bounds = array<i64: 16, 128>}, {pipeline_mode = #tpu.pipeline_mode<synchronous>, transform_indices = @transform_1, window_bounds = array<i64: 128, 128>}, {transform_indices = @transform_2, window_bounds = array<i64: 16, 1>}, {transform_indices = @transform_3, window_bounds = array<i64: 1, 128>}, {transform_indices = @transform_4, window_bounds = array<i64: 16, 128>}]} {
    %c0_i32 = arith.constant 0 : i32
    %0 = arith.cmpi eq, %arg1, %c0_i32 : i32
    %1 = arith.extui %0 : i1 to i32
    %c0_i32_0 = arith.constant 0 : i32
    %2 = arith.cmpi ne, %1, %c0_i32_0 : i32
    scf.if %2 {
      %cst_19 = arith.constant 0.000000e+00 : f32
      %34 = vector.broadcast %cst_19 : f32 to vector<16x128xf32>
      %c0_20 = arith.constant 0 : index
      %c0_21 = arith.constant 0 : index
      %35 = vector.load %arg7[%c0_20, %c0_21] : memref<16x128xf32, #tpu.memory_space<vmem>>, vector<16x128xf32>
      tpu.vector_store %arg7[%c0_20, %c0_21], %34 {strides = array<i32>} : memref<16x128xf32, #tpu.memory_space<vmem>>, vector<16x128xf32>,
      %cst_22 = arith.constant 0.000000e+00 : f32
      %36 = vector.broadcast %cst_22 : f32 to vector<16x1xf32>
      %c0_23 = arith.constant 0 : index
      %c0_24 = arith.constant 0 : index
      %37 = vector.load %arg8[%c0_23, %c0_24] : memref<16x1xf32, #tpu.memory_space<vmem>>, vector<16x1xf32>
      tpu.vector_store %arg8[%c0_23, %c0_24], %36 {strides = array<i32>} : memref<16x1xf32, #tpu.memory_space<vmem>>, vector<16x1xf32>,
    } else {
    }
    %c128_i32 = arith.constant 128 : i32
    %3 = arith.muli %arg1, %c128_i32 : i32
    %4 = tpu.assume_multiple %3, 128 : i32
    %5 = arith.index_cast %4 : i32 to index
    %c0 = arith.constant 0 : index
    %6 = vector.load %arg3[%5, %c0] : memref<128x128xbf16, #tpu.memory_space<vmem>>, vector<128x128xbf16>
    %c0_1 = arith.constant 0 : index
    %c0_2 = arith.constant 0 : index
    %7 = vector.load %arg4[%c0_1, %c0_2] : memref<16x1xf32, #tpu.memory_space<vmem>>, vector<16x1xf32>
    %c0_3 = arith.constant 0 : index
    %c0_4 = arith.constant 0 : index
    %8 = vector.load %arg5[%c0_3, %c0_4] : memref<1x128xf32, #tpu.memory_space<vmem>>, vector<1x128xf32>
    %9 = vector.broadcast %7 : vector<16x1xf32> to vector<16x128xf32>
    %10 = vector.broadcast %8 : vector<1x128xf32> to vector<16x128xf32>
    %11 = arith.addf %9, %10 : vector<16x128xf32>
    %12 = arith.negf %11 : vector<16x128xf32>
    %13 = math.exp %12 : vector<16x128xf32>
    %cst = arith.constant 1.000000e+00 : f32
    %14 = vector.broadcast %cst : f32 to vector<16x128xf32>
    %15 = arith.addf %14, %13 : vector<16x128xf32>
    %16 = arith.divf %14, %15 : vector<16x128xf32>
    %c0_5 = arith.constant 0 : index
    %c0_6 = arith.constant 0 : index
    %17 = vector.load %arg2[%c0_5, %c0_6] : memref<16x128xbf16, #tpu.memory_space<vmem>>, vector<16x128xbf16>
    %18 = arith.extf %17 : vector<16x128xbf16> to vector<16x128xf32>
    %19 = arith.mulf %16, %18 : vector<16x128xf32>
    %c0_7 = arith.constant 0 : index
    %c0_8 = arith.constant 0 : index
    %20 = vector.load %arg7[%c0_7, %c0_8] : memref<16x128xf32, #tpu.memory_space<vmem>>, vector<16x128xf32>
    %21 = arith.truncf %19 : vector<16x128xf32> to vector<16x128xbf16>
    %cst_9 = arith.constant dense<0.000000e+00> : vector<16x128xf32>
    %22 = tpu.matmul %21, %6, %cst_9 {dimension_numbers = #tpu.dot_dimension_numbers<[1], [0], [0], [1], [0, 0, 1, 1], [], []>} : vector<16x128xbf16>, vector<128x128xbf16>, vector<16x128xf32> -> vector<16x128xf32>
    %23 = arith.addf %20, %22 : vector<16x128xf32>
    %c0_10 = arith.constant 0 : index
    %c0_11 = arith.constant 0 : index
    %24 = vector.load %arg7[%c0_10, %c0_11] : memref<16x128xf32, #tpu.memory_space<vmem>>, vector<16x128xf32>
    tpu.vector_store %arg7[%c0_10, %c0_11], %23 {strides = array<i32>} : memref<16x128xf32, #tpu.memory_space<vmem>>, vector<16x128xf32>,
    %c0_12 = arith.constant 0 : index
    %c0_13 = arith.constant 0 : index
    %25 = vector.load %arg8[%c0_12, %c0_13] : memref<16x1xf32, #tpu.memory_space<vmem>>, vector<16x1xf32>
    %26 = arith.mulf %19, %19 : vector<16x128xf32>
    %cst_14 = arith.constant dense<0.000000e+00> : vector<16xf32>
    %27 = vector.multi_reduction <add>, %26, %cst_14 [1] : vector<16x128xf32> to vector<16xf32>
    %28 = vector.shape_cast %27 : vector<16xf32> to vector<16x1xf32>
    %29 = arith.addf %25, %28 : vector<16x1xf32>
    %c0_15 = arith.constant 0 : index
    %c0_16 = arith.constant 0 : index
    %30 = vector.load %arg8[%c0_15, %c0_16] : memref<16x1xf32, #tpu.memory_space<vmem>>, vector<16x1xf32>
    tpu.vector_store %arg8[%c0_15, %c0_16], %29 {strides = array<i32>} : memref<16x1xf32, #tpu.memory_space<vmem>>, vector<16x1xf32>,
    %c0_i32_17 = arith.constant 0 : i32
    %31 = arith.cmpi eq, %arg1, %c0_i32_17 : i32
    %32 = arith.extui %31 : i1 to i32
    %c0_i32_18 = arith.constant 0 : i32
    %33 = arith.cmpi ne, %32, %c0_i32_18 : i32
    scf.if %33 {
      %c0_19 = arith.constant 0 : index
      %c0_20 = arith.constant 0 : index
      %34 = vector.load %arg7[%c0_19, %c0_20] : memref<16x128xf32, #tpu.memory_space<vmem>>, vector<16x128xf32>
      %c0_21 = arith.constant 0 : index
      %c0_22 = arith.constant 0 : index
      %35 = vector.load %arg8[%c0_21, %c0_22] : memref<16x1xf32, #tpu.memory_space<vmem>>, vector<16x1xf32>
      %36 = math.sqrt %35 : vector<16x1xf32>
      %cst_23 = arith.constant 1.000000e-10 : f32
      %37 = vector.broadcast %cst_23 : f32 to vector<16x1xf32>
      %38 = arith.addf %36, %37 : vector<16x1xf32>
      %39 = tpu.reciprocal %38 : vector<16x1xf32> -> vector<16x1xf32>
      %40 = vector.broadcast %39 : vector<16x1xf32> to vector<16x128xf32>
      %41 = arith.mulf %34, %40 : vector<16x128xf32>
      %c0_24 = arith.constant 0 : index
      %c0_25 = arith.constant 0 : index
      %42 = vector.load %arg6[%c0_24, %c0_25] : memref<16x128xf32, #tpu.memory_space<vmem>>, vector<16x128xf32>
      tpu.vector_store %arg6[%c0_24, %c0_25], %41 {strides = array<i32>} : memref<16x128xf32, #tpu.memory_space<vmem>>, vector<16x128xf32>,
    } else {
    }
    return
  }
  func.func @transform_0(%arg0: i32, %arg1: i32) -> (i32, i32) {
    %c0_i32 = arith.constant 0 : i32
    return %arg0, %arg1 : i32, i32
  }
  func.func @transform_1(%arg0: i32, %arg1: i32) -> (i32, i32) {
    %c0_i32 = arith.constant 0 : i32
    %c0_i32_0 = arith.constant 0 : i32
    %c0_i32_1 = arith.constant 0 : i32
    return %c0_i32, %c0_i32_0 : i32, i32
  }
  func.func @transform_2(%arg0: i32, %arg1: i32) -> (i32, i32) {
    %c0_i32 = arith.constant 0 : i32
    %c0_i32_0 = arith.constant 0 : i32
    return %arg0, %c0_i32 : i32, i32
  }
  func.func @transform_3(%arg0: i32, %arg1: i32) -> (i32, i32) {
    %c0_i32 = arith.constant 0 : i32
    %c0_i32_0 = arith.constant 0 : i32
    return %c0_i32, %arg1 : i32, i32
  }
  func.func @transform_4(%arg0: i32, %arg1: i32) -> (i32, i32) {
    %c0_i32 = arith.constant 0 : i32
    %c0_i32_0 = arith.constant 0 : i32
    return %arg0, %c0_i32 : i32, i32
  }
}

</mosaic_0001>

<llo_original>
// kernel: tpu_custom_call.1
$region0: #{tpu_custom_call.1}
  #allocation0 [shape = 'u32[]', space=smem, size = 0x4, offset = 0x4, fixed_abs, tag = 'smem constant byte address 0x4 - core index']
  #allocation1 [shape = 'u32[144,128]{1,0:T(1,128)}', space=vmem, size = 0x12000, scoped, tag = 'internal scratch']
  #allocation2 [shape = 'f32[16,128]{1,0:T(8,128)}', space=vmem, size = 0x2000, scoped, tag = 'scratch operand']
  #allocation3 [shape = 'f32[16,1]{1,0:T(8,128)}', space=vmem, size = 0x2000, scoped, tag = 'scratch operand']
  %s0 = inlined_call_operand.vmem [shape: bf16[16,128], index: 0, kind: input, shape index: {}]
  %s1 = inlined_call_operand.hbm [shape: bf16[128,128], index: 1, kind: input, shape index: {}]
  %s2 = inlined_call_operand.vmem [shape: f32[16,1], index: 2, kind: input, shape index: {}]
  %s3 = inlined_call_operand.vmem [shape: f32[1,128], index: 3, kind: input, shape index: {}]
  %s4 = inlined_call_operand.hbm [shape: f32[16,128], index: 4, kind: output, shape index: {}]
  %s5 = sld [smem:[#allocation0]]
  $region38: #{tpu_custom_call.1} parent=0
    _
  %s7 = ssub.s32 1, %s5
  %s8 = scalar_select 0, %s7, %s5
  $region1: #{tpu_custom_call.1} parent=0
    #allocation4 [shape = 'u8[32768]{0}', space=vmem, size = 0x8000, scoped, tag = 'input window, operand 1, single buffered']
    #allocation5 [shape = 's32[1]{0}', space=sflag, size = 0x4, scoped, tag = 'scoped memory for tpu_custom_call.1']
    #allocation6 [shape = 's32[1]{0}', space=sflag, size = 0x4, scoped, tag = 'scoped memory for tpu_custom_call.1']
    #allocation7 [shape = 'u8[8192]{0}', space=vmem, size = 0x2000, scoped, tag = 'output window, operand 0, single buffered']
    %9 = vsyncpa [#allocation5], 0
    %10 = vsyncpa [#allocation6], 0
    // Predicated region
    $region2: #{tpu_custom_call.1} parent=1 // pred_check
      _
    $region3: #{tpu_custom_call.1} parent=1 // pred_check_branch
      %12 = sbr.rel (0) target = $region5
    $region4: #{tpu_custom_call.1} parent=1 // pred_region
      _
    $region5: #{tpu_custom_call.1} parent=1 // pred_fallthru
      _
    // Predicated region
    $region6: #{tpu_custom_call.1} parent=1 // pred_check
      _
    $region7: #{tpu_custom_call.1} parent=1 // pred_check_branch
      %14 = sbr.rel (0) target = $region9
    $region8: #{tpu_custom_call.1} parent=1 // pred_region
      %s16 = ssub.s32 1024, 1024
      %17 = vsyncadd [#allocation5], %s16
      %s18 = sshll.u32 [#allocation4], 4
      %s19 = int_to_ptr.vmem [resolvable:$true] %s18
      %24 = dma.hbm_to_vmem [thread:$0]  %s1, 1024, %s19, [#allocation5], 64, 64, 4
    $region9: #{tpu_custom_call.1} parent=1 // pred_fallthru
      _
    // Predicated region
    $region10: #{tpu_custom_call.1} parent=1 // pred_check
      _
    $region11: #{tpu_custom_call.1} parent=1 // pred_check_branch
      %26 = sbr.rel (0) target = $region13
    $region12: #{tpu_custom_call.1} parent=1 // pred_region
      _
    $region13: #{tpu_custom_call.1} parent=1 // pred_fallthru
      _
    // Predicated region
    $region14: #{tpu_custom_call.1} parent=1 // pred_check
      _
    $region15: #{tpu_custom_call.1} parent=1 // pred_check_branch
      %28 = sbr.rel (0) target = $region17
    $region16: #{tpu_custom_call.1} parent=1 // pred_region
      _
    $region17: #{tpu_custom_call.1} parent=1 // pred_fallthru
      _
    // Predicated region
    $region18: #{tpu_custom_call.1} parent=1 // pred_check
      _
    $region19: #{tpu_custom_call.1} parent=1 // pred_check_branch
      %30 = sbr.rel (0) target = $region21
    $region20: #{tpu_custom_call.1} parent=1 // pred_region
      %31 = dma.done [#allocation5], 1024
    $region21: #{tpu_custom_call.1} parent=1 // pred_fallthru
      _
    %p33 = scmp.eq.s32.totalorder 0, 0
    // Predicated region
    $region22: #{tpu_custom_call.1} parent=1 // pred_check
      %p34 = pneg %p33
    $region23: #{tpu_custom_call.1} parent=1 // pred_check_branch
      %36 = sbr.rel (%p34) target = $region25
    $region24: #{tpu_custom_call.1} parent=1 // pred_region
      %37 = vst [vmem:[#allocation2] sm:$0xff] 0.0
      %38 = vst [vmem:[#allocation2 + $0x8] sm:$0xff] 0.0
      %vm39 = vcmask 7168
      %40 = vst.msk [vmem:[#allocation3] sm:$0xff] %vm39, 0.0
      %41 = vst.msk [vmem:[#allocation3 + $0x8] sm:$0xff] %vm39, 0.0
    $region25: #{tpu_custom_call.1} parent=1 // pred_fallthru
      _
    %s42 = smul.u32 0, 128
    %s43 = sshra.s32 %s42, 3
    %s44 = sand.u32 %s42, 7
    %s45 = smul.addr %s43, 4
    %s46 = scalar_lea.vmem [#allocation4], %s45
    %v47 = vld [vmem:[%s46] sm:$0xf]
    %v48 = vld [vmem:[%s46 + $0x4] sm:$0xf]
    %v49 = vld [vmem:[%s46 + $0x8] sm:$0xf]
    %v50 = vld [vmem:[%s46 + $0xc] sm:$0xf]
    %v51 = vld [vmem:[%s46 + $0x10] sm:$0xf]
    %v52 = vld [vmem:[%s46 + $0x14] sm:$0xf]
    %v53 = vld [vmem:[%s46 + $0x18] sm:$0xf]
    %v54 = vld [vmem:[%s46 + $0x1c] sm:$0xf]
    %v55 = vld [vmem:[%s46 + $0x20] sm:$0xf]
    %v56 = vld [vmem:[%s46 + $0x24] sm:$0xf]
    %v57 = vld [vmem:[%s46 + $0x28] sm:$0xf]
    %v58 = vld [vmem:[%s46 + $0x2c] sm:$0xf]
    %v59 = vld [vmem:[%s46 + $0x30] sm:$0xf]
    %v60 = vld [vmem:[%s46 + $0x34] sm:$0xf]
    %v61 = vld [vmem:[%s46 + $0x38] sm:$0xf]
    %v62 = vld [vmem:[%s46 + $0x3c] sm:$0xf]
    %v63 = vld [vmem:[%s2] sm:$0xff]
    %v64 = vld [vmem:[%s2 + $0x8] sm:$0xff]
    %v65 = vld [vmem:[%s3] sm:$0x1]
    %67 = vset.pattern.permute.xlu0 0
    %68 = vperm.xlu0 %67, %v63
    %v69 = vpop.permute.xlu0 %68
    %72 = vset.pattern.permute.xlu0 0
    %73 = vperm.xlu0 %72, %v64
    %v74 = vpop.permute.xlu0 %73
    %v77 = vlaneseq
    %v78 = vshrl.u32 %v77, 7
    %v79 = vsub.s32 0, %v78
    %v80 = vrot.slane %v65, %v79
    %v82 = vadd.f32 %v69, %v80
    %v83 = vadd.f32 %v74, %v80
    %v84 = vxor.u32 %v82, 2147483648
    %v85 = vxor.u32 %v83, 2147483648
    %v86 = vmul.f32 %v84, 1.442695
    %v87 = vpow.pop %v86
    %v88 = vmul.f32 %v85, 1.442695
    %v89 = vpow.pop %v88
    %v90 = vadd.f32 %v87, 1.0
    %v91 = vadd.f32 %v89, 1.0
    %v92 = vrcp.pop %v90
    %v93 = vmul.f32 1.0, %v92
    %v94 = vrcp.pop %v91
    %v95 = vmul.f32 1.0, %v94
    %v96 = vld [vmem:[%s0] sm:$0xf]
    %v97 = vld [vmem:[%s0 + $0x4] sm:$0xf]
    %v98 = vunpack.c.l.bf16 %v96
    %v99 = vunpack.c.l.bf16 %v97
    %v100 = vmul.f32 %v93, %v98
    %v101 = vmul.f32 %v95, %v99
    %v102 = vld [vmem:[#allocation2] sm:$0xff]
    %v103 = vld [vmem:[#allocation2 + $0x8] sm:$0xff]
    %v104 = vpack.c.bf16 %v101, %v100
    %v121 = vunpack.c.l.b16 %v47
    %v122 = vunpack.c.l.b16 %v48
    %v123 = vunpack.c.l.b16 %v49
    %v124 = vunpack.c.l.b16 %v50
    %v125 = vunpack.c.l.b16 %v51
    %v126 = vunpack.c.l.b16 %v52
    %v127 = vunpack.c.l.b16 %v53
    %v128 = vunpack.c.l.b16 %v54
    %v129 = vunpack.c.l.b16 %v55
    %v130 = vunpack.c.l.b16 %v56
    %v131 = vunpack.c.l.b16 %v57
    %v132 = vunpack.c.l.b16 %v58
    %v133 = vunpack.c.l.b16 %v59
    %v134 = vunpack.c.l.b16 %v60
    %v135 = vunpack.c.l.b16 %v61
    %v136 = vunpack.c.l.b16 %v62
    %v137 = vpack.c.b16 %v122, %v121
    %v138 = vpack.c.b16 %v124, %v123
    %v139 = vpack.c.b16 %v126, %v125
    %v140 = vpack.c.b16 %v128, %v127
    %v141 = vpack.c.b16 %v130, %v129
    %v142 = vpack.c.b16 %v132, %v131
    %v143 = vpack.c.b16 %v134, %v133
    %v144 = vpack.c.b16 %v136, %v135
    %153 = vmatprep.subr.bf16.mxu0 0
    %154 = vmatpush1.bf16.msra.mxu0 %v144
    %155 = vmatprep.subr.bf16.mxu0 0
    %156 = vmatpush1.bf16.msra.mxu0 %v143
    %157 = vmatprep.subr.bf16.mxu0 0
    %158 = vmatpush1.bf16.msra.mxu0 %v142
    %159 = vmatprep.subr.bf16.mxu0 0
    %160 = vmatpush1.bf16.msra.mxu0 %v141
    %161 = vmatprep.subr.bf16.mxu0 0
    %162 = vmatpush1.bf16.msra.mxu0 %v140
    %163 = vmatprep.subr.bf16.mxu0 0
    %164 = vmatpush1.bf16.msra.mxu0 %v139
    %165 = vmatprep.subr.bf16.mxu0 0
    %166 = vmatpush1.bf16.msra.mxu0 %v138
    %167 = vmatprep.subr.bf16.mxu0 0
    %168 = vmatpush1.bf16.msra.mxu0 %v137
    %169 = vmatprep.subr.bf16.mxu0 0
    %170 = vmatpush2.bf16.msra.mxu0 0
    %171 = vmatprep.subr.bf16.mxu0 0
    %172 = vmatpush2.bf16.msra.mxu0 0
    %173 = vmatprep.subr.bf16.mxu0 0
    %174 = vmatpush2.bf16.msra.mxu0 0
    %175 = vmatprep.subr.bf16.mxu0 0
    %176 = vmatpush2.bf16.msra.mxu0 0
    %177 = vmatprep.subr.bf16.mxu0 0
    %178 = vmatpush2.bf16.msra.mxu0 0
    %179 = vmatprep.subr.bf16.mxu0 0
    %180 = vmatpush2.bf16.msra.mxu0 0
    %181 = vmatprep.subr.bf16.mxu0 0
    %182 = vmatpush2.bf16.msra.mxu0 0
    %183 = vmatprep.subr.bf16.mxu0 0
    %184 = vmatpush2.bf16.msra.mxu0 0
    %185 = vmatprep.mubr.bf16.mxu0 0
    %186 = vmatmul.mubr.bf16.gmra.mxu0 %v104
    %v187 = vpop.f32.mrf.mxu0
    %v188 = vadd.f32 0.0, %v187
    %v189 = vpop.f32.mrf.mxu0
    %v190 = vpop.f32.mrf.mxu0
    %v191 = vadd.f32 0.0, %v190
    %v192 = vpop.f32.mrf.mxu0
    %193 = vdwg.mxu0
    %v194 = vadd.f32 %v102, %v188
    %v195 = vadd.f32 %v103, %v191
    %196 = vst [vmem:[#allocation2] sm:$0xff] %v194
    %197 = vst [vmem:[#allocation2 + $0x8] sm:$0xff] %v195
    %v198 = vld [vmem:[#allocation3] sm:$0xff]
    %v199 = vld [vmem:[#allocation3 + $0x8] sm:$0xff]
    %v200 = vmul.f32 %v100, %v100
    %v201 = vmul.f32 %v101, %v101
    %202 = vadd.xlane.f32.xlu0 %v200
    %v203 = vpop.xlane.xlu0 %202
    %204 = vadd.xlane.f32.xlu0 %v201
    %v205 = vpop.xlane.xlu0 %204
    %v206 = vadd.f32 %v198, %v203
    %v207 = vadd.f32 %v199, %v205
    %vm208 = vcmask 7168
    %209 = vst.msk [vmem:[#allocation3] sm:$0xff] %vm208, %v206
    %210 = vst.msk [vmem:[#allocation3 + $0x8] sm:$0xff] %vm208, %v207
    // Predicated region
    $region26: #{tpu_custom_call.1} parent=1 // pred_check
      %p211 = pneg %p33
    $region27: #{tpu_custom_call.1} parent=1 // pred_check_branch
      %213 = sbr.rel (%p211) target = $region29
    $region28: #{tpu_custom_call.1} parent=1 // pred_region
      %v214 = vld [vmem:[#allocation2] sm:$0xff]
      %v215 = vld [vmem:[#allocation2 + $0x8] sm:$0xff]
      %v216 = vld [vmem:[#allocation3] sm:$0xff]
      %v217 = vld [vmem:[#allocation3 + $0x8] sm:$0xff]
      %v218 = vrsqrt.pop %v216
      %v219 = vmul.f32 %v216, %v218
      %vm220 = vcmp.eq.f32.partialorder %v216, inf
      %v221 = vsel %vm220, %v216, %v219
      %vm222 = vcmp.eq.f32.partialorder %v216, 0.0
      %v223 = vand.u32 %v216, 2147483648
      %v224 = vsel %vm222, %v223, %v221
      %v225 = vrsqrt.pop %v217
      %v226 = vmul.f32 %v217, %v225
      %vm227 = vcmp.eq.f32.partialorder %v217, inf
      %v228 = vsel %vm227, %v217, %v226
      %vm229 = vcmp.eq.f32.partialorder %v217, 0.0
      %v230 = vand.u32 %v217, 2147483648
      %v231 = vsel %vm229, %v230, %v228
      %v232 = vadd.f32 %v224, 1e-10
      %v233 = vadd.f32 %v231, 1e-10
      %v234 = vrcp.pop %v232
      %v235 = vrcp.pop %v233
      %237 = vset.pattern.permute.xlu0 0
      %238 = vperm.xlu0 %237, %v234
      %v239 = vpop.permute.xlu0 %238
      %242 = vset.pattern.permute.xlu0 0
      %243 = vperm.xlu0 %242, %v235
      %v244 = vpop.permute.xlu0 %243
      %v246 = vmul.f32 %v214, %v239
      %v247 = vmul.f32 %v215, %v244
      %248 = vst [vmem:[#allocation7] sm:$0xff] %v246
      %249 = vst [vmem:[#allocation7 + $0x8] sm:$0xff] %v247
    $region29: #{tpu_custom_call.1} parent=1 // pred_fallthru
      _
    // Predicated region
    $region30: #{tpu_custom_call.1} parent=1 // pred_check
      _
    $region31: #{tpu_custom_call.1} parent=1 // pred_check_branch
      %251 = sbr.rel (0) target = $region33
    $region32: #{tpu_custom_call.1} parent=1 // pred_region
      %s253 = ssub.s32 256, 256
      %254 = vsyncadd [#allocation6], %s253
      %s255 = sshll.u32 [#allocation7], 4
      %s256 = int_to_ptr.vmem [resolvable:$true] %s255
      %261 = dma.vmem_to_hbm [thread:$0]  %s256, 256, %s4, [#allocation6], 128, 128, 8
    $region33: #{tpu_custom_call.1} parent=1 // pred_fallthru
      _
    // Predicated region
    $region34: #{tpu_custom_call.1} parent=1 // pred_check
      _
    $region35: #{tpu_custom_call.1} parent=1 // pred_check_branch
      %263 = sbr.rel (0) target = $region37
    $region36: #{tpu_custom_call.1} parent=1 // pred_region
      %264 = dma.done [#allocation6], 256
    $region37: #{tpu_custom_call.1} parent=1 // pred_fallthru
      _
    %265 = vsyncpa [#allocation5], 1
    %266 = vsyncpa [#allocation6], 1

</llo_original>
